<compile_context>
chip_gen: v7x
topology: tpu7x:2x2x1
jax: 0.10.0
libtpu: 0.0.40
codegen_flags: <defaults>
</compile_context>

<pallas_src>
import jax
import jax.numpy as jnp
from jax.experimental import pallas as pl
from jax.experimental.pallas import tpu as pltpu

# ScaleShiftBlock parameters (scaling_std / scaling_mean).
SCALING_STD = 1.3
SCALING_MEAN = 0.5


def _pooled_readout_kernel(nf0_ref, nf1_ref, onehot_ref, w1a_ref, w0s_ref,
                           w1bs_ref, out_ref):
    """Processes B_blk structures per grid step.

    nf0_ref    : [B_blk, N, D0]        bf16  node feats, readout 0
    nf1_ref    : [B_blk, N, D1]        bf16  node feats, readout 1
    onehot_ref : [B_blk, G_pad, N]     f32   per-graph node masks
    w1a_ref    : [D1, H]               bf16  readout-1 hidden weight
    w0s_ref    : [D0, O_pad]           bf16  W0  * scaling_std (lane-padded)
    w1bs_ref   : [H,  O_pad]           bf16  W1b * scaling_std (lane-padded)
    out_ref    : [B_blk, G_pad, O_pad] f32   pooled per-graph features
    """
    b_blk, n, d0 = nf0_ref.shape
    d1 = nf1_ref.shape[-1]
    o_pad = out_ref.shape[-1]

    # Flatten the structure block into a single MXU operand; N is a multiple
    # of the sublane tile, so this reshape is layout-free.
    nf0 = nf0_ref[...].reshape(b_blk * n, d0)
    nf1 = nf1_ref[...].reshape(b_blk * n, d1)

    # readout_1 hidden + SiLU gate (EUP sigmoid + VPU mul, kept in f32).
    h = jnp.dot(nf1, w1a_ref[...], preferred_element_type=jnp.float32)
    h = h * jax.nn.sigmoid(h)

    # Fused output projection without an in-kernel concat: two bf16 MXU pushes
    # accumulating into one f32 value; scaling_std already folded into weights.
    node = jnp.dot(nf0, w0s_ref[...], preferred_element_type=jnp.float32)
    node = node + jnp.dot(h.astype(jnp.bfloat16), w1bs_ref[...],
                          preferred_element_type=jnp.float32)
    node = node.reshape(b_blk, n, o_pad)                    # [B_blk, N, O_pad]

    onehot = onehot_ref[...]                                # [B_blk, G_pad, N]
    counts = jnp.sum(onehot, axis=-1, keepdims=True)        # [B_blk, G_pad, 1]

    # Segment-sum pooling as masked VPU multiply + XLU sublane reduction
    # (exact f32, no MXU round-trip).  scaling_mean is applied once per graph
    # as mean * node_count, equivalent to the per-node shift-then-sum.
    # NOTE: padded output lanes [O:O_pad] also receive mean * count; the
    # wrapper slices them away.  Nodes with out-of-range graph ids are dropped
    # (same as jax.ops.segment_sum's default).
    for b in range(b_blk):                                  # static, B_blk small
        pooled_b = jnp.sum(onehot[b][:, :, None] * node[b][None, :, :],
                           axis=1)                          # [G_pad, O_pad]
        out_ref[b] = pooled_b + SCALING_MEAN * counts[b]


def pooled_readout_head(nf0, nf1, batch_idx, num_graphs, w0, w1a, w1b,
                        *, b_block=None):
    """Batched wrapper.

    nf0, nf1  : [B, N, D]  node features per structure (f32)
    batch_idx : [B, N]     graph id per node (values in [0, num_graphs))
    w0        : [D0, O], w1a : [D1, H], w1b : [H, O]   (f32, bias-free)
    returns   : [B, num_graphs, O]  f32
    """
    B, N, D0 = nf0.shape
    D1 = nf1.shape[-1]
    H = w1a.shape[-1]
    O = w0.shape[-1]
    o_pad = 128 * pl.cdiv(O, 128)           # lane-dense output block
    g_pad = 8 * pl.cdiv(num_graphs, 8)      # sublane-aligned graph axis

    # Structures per grid step: default gives 2 steps (one per v7x TensorCore);
    # pass b_block=B on single-TC chips (v5e/v6e) for a single step.
    if b_block is None:
        b_block = B // 2 if (B >= 2 and B % 2 == 0) else B
    if B % b_block != 0:
        b_block = B
    num_steps = B // b_block

    # Host-side (compile-time-fusable) parameter prep: fold scaling_std, pad
    # output lanes with zero columns, cast MXU operands to bf16 (accumulation
    # stays f32 inside the kernel).
    w0s = jnp.pad(w0 * SCALING_STD, ((0, 0), (0, o_pad - O))).astype(jnp.bfloat16)
    w1bs = jnp.pad(w1b * SCALING_STD, ((0, 0), (0, o_pad - O))).astype(jnp.bfloat16)
    w1a_b = w1a.astype(jnp.bfloat16)
    nf0_b = nf0.astype(jnp.bfloat16)
    nf1_b = nf1.astype(jnp.bfloat16)

    # Per-graph one-hot node masks replace the [N,1] i32 batch-id tile.
    onehot = (batch_idx[:, None, :] ==
              jnp.arange(g_pad, dtype=batch_idx.dtype)[None, :, None]
              ).astype(jnp.float32)                            # [B, g_pad, N]

    flops = (2 * B * N * (D1 * H + D0 * o_pad + H * o_pad)
             + 2 * B * g_pad * N * o_pad)
    bytes_accessed = (
        2 * B * N * (D0 + D1)                     # bf16 node feats
        + 2 * (D1 * H + D0 * o_pad + H * o_pad)   # bf16 weights
        + 4 * B * g_pad * N                       # f32 one-hot masks
        + 4 * B * g_pad * o_pad)                  # f32 output
    cost = pl.CostEstimate(flops=flops, transcendentals=B * N * H,
                           bytes_accessed=bytes_accessed)

    out = pl.pallas_call(
        _pooled_readout_kernel,
        out_shape=jax.ShapeDtypeStruct((B, g_pad, o_pad), jnp.float32),
        grid=(num_steps,),
        in_specs=[
            pl.BlockSpec((b_block, N, D0), lambda i: (i, 0, 0)),
            pl.BlockSpec((b_block, N, D1), lambda i: (i, 0, 0)),
            pl.BlockSpec((b_block, g_pad, N), lambda i: (i, 0, 0)),
            # Constant-index weight blocks (single-buffering them via
            # pipeline_mode would save VMEM on v7x, negligible at these sizes).
            pl.BlockSpec((D1, H), lambda i: (0, 0)),
            pl.BlockSpec((D0, o_pad), lambda i: (0, 0)),
            pl.BlockSpec((H, o_pad), lambda i: (0, 0)),
        ],
        out_specs=pl.BlockSpec((b_block, g_pad, o_pad), lambda i: (i, 0, 0)),
        compiler_params=pltpu.CompilerParams(
            dimension_semantics=("parallel",),   # v7x: 2 TCs split the steps
        ),
        cost_estimate=cost,
    )(nf0_b, nf1_b, onehot, w1a_b, w0s, w1bs)

    return out[:, :num_graphs, :O]


if __name__ == "__main__":
    # Small shapes consistent with the module's forward pass.
    B = 4            # independent structures batched into one pallas_call
    N_NODES = 16     # nodes per structure
    D0 = 32          # in_irreps dim for readout 0 (scalar channels)
    D1 = 32          # in_irreps dim for readout 1
    H = 16           # mlp_irreps hidden dim
    O = 4            # out_irreps dim
    NUM_GRAPHS = 2   # graphs per structure (data['num_graphs'])

    key = jax.random.PRNGKey(0)
    k_nf0, k_nf1, k_w0, k_w1a, k_w1b = jax.random.split(key, 5)

    node_feats_0 = jax.random.normal(k_nf0, (B, N_NODES, D0), dtype=jnp.float32)
    node_feats_1 = jax.random.normal(k_nf1, (B, N_NODES, D1), dtype=jnp.float32)
    # e3nn Linear layers are bias-free.
    w0 = jax.random.normal(k_w0, (D0, O), dtype=jnp.float32) / jnp.sqrt(D0)
    w1a = jax.random.normal(k_w1a, (D1, H), dtype=jnp.float32) / jnp.sqrt(D1)
    w1b = jax.random.normal(k_w1b, (H, O), dtype=jnp.float32) / jnp.sqrt(H)
    # Per-structure graph assignment (data['batch']).
    batch_one = jnp.concatenate([
        jnp.zeros((N_NODES // 2,), dtype=jnp.int32),
        jnp.ones((N_NODES - N_NODES // 2,), dtype=jnp.int32),
    ])
    batch_idx = jnp.tile(batch_one[None, :], (B, 1))

    pooled = pooled_readout_head(node_feats_0, node_feats_1, batch_idx,
                                 NUM_GRAPHS, w0, w1a, w1b)
    jax.block_until_ready(pooled)

    # Pure-JAX reference mirroring the kernel's numerics (bf16 MXU operands,
    # f32 accumulation) for the same forward pass.
    w0s_ref = (w0 * SCALING_STD).astype(jnp.bfloat16)
    w1bs_ref = (w1b * SCALING_STD).astype(jnp.bfloat16)
    h_ref = jnp.einsum("bnd,dh->bnh", node_feats_1.astype(jnp.bfloat16),
                       w1a.astype(jnp.bfloat16),
                       preferred_element_type=jnp.float32)
    h_ref = h_ref * jax.nn.sigmoid(h_ref)
    node_ref = jnp.einsum("bnd,do->bno", node_feats_0.astype(jnp.bfloat16),
                          w0s_ref, preferred_element_type=jnp.float32)
    node_ref = node_ref + jnp.einsum("bnh,ho->bno", h_ref.astype(jnp.bfloat16),
                                     w1bs_ref,
                                     preferred_element_type=jnp.float32)
    node_ref = node_ref + SCALING_MEAN
    pooled_ref = jax.vmap(
        lambda nd, bt: jax.ops.segment_sum(nd, bt, num_segments=NUM_GRAPHS)
    )(node_ref, batch_idx)

    assert pooled.shape == (B, NUM_GRAPHS, O)
    max_err = float(jnp.max(jnp.abs(pooled - pooled_ref)))
    assert jnp.allclose(pooled, pooled_ref, atol=2e-3, rtol=2e-3), max_err
    print("KERNEL_OK")
</pallas_src>

<mosaic_0001>
module attributes {stable_mosaic.version = 11 : i64} {
  func.func @_pooled_readout_kernel(%arg0: i32, %arg1: memref<2x16x32xbf16, #tpu.memory_space<vmem>>, %arg2: memref<2x16x32xbf16, #tpu.memory_space<vmem>>, %arg3: memref<2x8x16xf32, #tpu.memory_space<vmem>>, %arg4: memref<32x16xbf16, #tpu.memory_space<vmem>>, %arg5: memref<32x128xbf16, #tpu.memory_space<vmem>>, %arg6: memref<16x128xbf16, #tpu.memory_space<vmem>>, %arg7: memref<2x8x128xf32, #tpu.memory_space<vmem>>) attributes {dimension_semantics = [#tpu.dimension_semantics<parallel>], iteration_bounds = array<i64: 2>, scalar_prefetch = 0 : i64, scratch_operands = 0 : i64, tpu.core_type = #tpu.core_type<tc>, window_params = [{transform_indices = @transform_0, window_bounds = array<i64: 2, 16, 32>}, {transform_indices = @transform_1, window_bounds = array<i64: 2, 16, 32>}, {transform_indices = @transform_2, window_bounds = array<i64: 2, 8, 16>}, {pipeline_mode = #tpu.pipeline_mode<synchronous>, transform_indices = @transform_3, window_bounds = array<i64: 32, 16>}, {pipeline_mode = #tpu.pipeline_mode<synchronous>, transform_indices = @transform_4, window_bounds = array<i64: 32, 128>}, {pipeline_mode = #tpu.pipeline_mode<synchronous>, transform_indices = @transform_5, window_bounds = array<i64: 16, 128>}, {transform_indices = @transform_6, window_bounds = array<i64: 2, 8, 128>}]} {
    %c0 = arith.constant 0 : index
    %c0_0 = arith.constant 0 : index
    %c0_1 = arith.constant 0 : index
    %0 = vector.load %arg1[%c0, %c0_0, %c0_1] : memref<2x16x32xbf16, #tpu.memory_space<vmem>>, vector<2x16x32xbf16>
    %1 = vector.shape_cast %0 : vector<2x16x32xbf16> to vector<32x32xbf16>
    %c0_2 = arith.constant 0 : index
    %c0_3 = arith.constant 0 : index
    %c0_4 = arith.constant 0 : index
    %2 = vector.load %arg2[%c0_2, %c0_3, %c0_4] : memref<2x16x32xbf16, #tpu.memory_space<vmem>>, vector<2x16x32xbf16>
    %3 = vector.shape_cast %2 : vector<2x16x32xbf16> to vector<32x32xbf16>
    %c0_5 = arith.constant 0 : index
    %c0_6 = arith.constant 0 : index
    %4 = vector.load %arg4[%c0_5, %c0_6] : memref<32x16xbf16, #tpu.memory_space<vmem>>, vector<32x16xbf16>
    %cst = arith.constant dense<0.000000e+00> : vector<32x16xf32>
    %5 = tpu.matmul %3, %4, %cst {dimension_numbers = #tpu.dot_dimension_numbers<[1], [0], [0], [1], [0, 0, 1, 1], [], []>} : vector<32x32xbf16>, vector<32x16xbf16>, vector<32x16xf32> -> vector<32x16xf32>
    %6 = arith.negf %5 : vector<32x16xf32>
    %7 = math.exp %6 : vector<32x16xf32>
    %cst_7 = arith.constant 1.000000e+00 : f32
    %8 = vector.broadcast %cst_7 : f32 to vector<32x16xf32>
    %9 = arith.addf %8, %7 : vector<32x16xf32>
    %10 = arith.divf %8, %9 : vector<32x16xf32>
    %11 = arith.mulf %5, %10 : vector<32x16xf32>
    %c0_8 = arith.constant 0 : index
    %c0_9 = arith.constant 0 : index
    %12 = vector.load %arg5[%c0_8, %c0_9] : memref<32x128xbf16, #tpu.memory_space<vmem>>, vector<32x128xbf16>
    %cst_10 = arith.constant dense<0.000000e+00> : vector<32x128xf32>
    %13 = tpu.matmul %1, %12, %cst_10 {dimension_numbers = #tpu.dot_dimension_numbers<[1], [0], [0], [1], [0, 0, 1, 1], [], []>} : vector<32x32xbf16>, vector<32x128xbf16>, vector<32x128xf32> -> vector<32x128xf32>
    %14 = arith.truncf %11 : vector<32x16xf32> to vector<32x16xbf16>
    %c0_11 = arith.constant 0 : index
    %c0_12 = arith.constant 0 : index
    %15 = vector.load %arg6[%c0_11, %c0_12] : memref<16x128xbf16, #tpu.memory_space<vmem>>, vector<16x128xbf16>
    %cst_13 = arith.constant dense<0.000000e+00> : vector<32x128xf32>
    %16 = tpu.matmul %14, %15, %cst_13 {dimension_numbers = #tpu.dot_dimension_numbers<[1], [0], [0], [1], [0, 0, 1, 1], [], []>} : vector<32x16xbf16>, vector<16x128xbf16>, vector<32x128xf32> -> vector<32x128xf32>
    %17 = arith.addf %13, %16 : vector<32x128xf32>
    %18 = vector.shape_cast %17 : vector<32x128xf32> to vector<2x16x128xf32>
    %c0_14 = arith.constant 0 : index
    %c0_15 = arith.constant 0 : index
    %c0_16 = arith.constant 0 : index
    %19 = vector.load %arg3[%c0_14, %c0_15, %c0_16] : memref<2x8x16xf32, #tpu.memory_space<vmem>>, vector<2x8x16xf32>
    %cst_17 = arith.constant dense<0.000000e+00> : vector<2x8xf32>
    %20 = vector.multi_reduction <add>, %19, %cst_17 [2] : vector<2x8x16xf32> to vector<2x8xf32>
    %21 = vector.shape_cast %20 : vector<2x8xf32> to vector<2x8x1xf32>
    %22 = vector.extract_strided_slice %19 {offsets = [0, 0, 0], sizes = [1, 8, 16], strides = [1, 1, 1]} : vector<2x8x16xf32> to vector<1x8x16xf32>
    %23 = vector.shape_cast %22 : vector<1x8x16xf32> to vector<8x16xf32>
    %24 = vector.shape_cast %23 : vector<8x16xf32> to vector<8x16x1xf32>
    %25 = vector.extract_strided_slice %18 {offsets = [0, 0, 0], sizes = [1, 16, 128], strides = [1, 1, 1]} : vector<2x16x128xf32> to vector<1x16x128xf32>
    %26 = vector.shape_cast %25 : vector<1x16x128xf32> to vector<16x128xf32>
    %27 = vector.shape_cast %26 : vector<16x128xf32> to vector<1x16x128xf32>
    %28 = vector.broadcast %24 : vector<8x16x1xf32> to vector<8x16x128xf32>
    %29 = vector.broadcast %27 : vector<1x16x128xf32> to vector<8x16x128xf32>
    %30 = arith.mulf %28, %29 : vector<8x16x128xf32>
    %cst_18 = arith.constant dense<0.000000e+00> : vector<8x128xf32>
    %31 = vector.multi_reduction <add>, %30, %cst_18 [1] : vector<8x16x128xf32> to vector<8x128xf32>
    %32 = vector.extract_strided_slice %21 {offsets = [0, 0, 0], sizes = [1, 8, 1], strides = [1, 1, 1]} : vector<2x8x1xf32> to vector<1x8x1xf32>
    %33 = vector.shape_cast %32 : vector<1x8x1xf32> to vector<8x1xf32>
    %cst_19 = arith.constant 5.000000e-01 : f32
    %34 = vector.broadcast %cst_19 : f32 to vector<8x1xf32>
    %35 = arith.mulf %34, %33 : vector<8x1xf32>
    %36 = vector.broadcast %35 : vector<8x1xf32> to vector<8x128xf32>
    %37 = arith.addf %31, %36 : vector<8x128xf32>
    %c0_20 = arith.constant 0 : index
    %c0_21 = arith.constant 0 : index
    %c0_22 = arith.constant 0 : index
    %38 = vector.load %arg7[%c0_20, %c0_21, %c0_22] : memref<2x8x128xf32, #tpu.memory_space<vmem>>, vector<1x8x128xf32>
    %39 = vector.shape_cast %38 : vector<1x8x128xf32> to vector<8x128xf32>
    %40 = vector.shape_cast %37 : vector<8x128xf32> to vector<1x8x128xf32>
    tpu.vector_store %arg7[%c0_20, %c0_21, %c0_22], %40 {strides = array<i32>} : memref<2x8x128xf32, #tpu.memory_space<vmem>>, vector<1x8x128xf32>,
    %41 = vector.extract_strided_slice %19 {offsets = [1, 0, 0], sizes = [1, 8, 16], strides = [1, 1, 1]} : vector<2x8x16xf32> to vector<1x8x16xf32>
    %42 = vector.shape_cast %41 : vector<1x8x16xf32> to vector<8x16xf32>
    %43 = vector.shape_cast %42 : vector<8x16xf32> to vector<8x16x1xf32>
    %44 = vector.extract_strided_slice %18 {offsets = [1, 0, 0], sizes = [1, 16, 128], strides = [1, 1, 1]} : vector<2x16x128xf32> to vector<1x16x128xf32>
    %45 = vector.shape_cast %44 : vector<1x16x128xf32> to vector<16x128xf32>
    %46 = vector.shape_cast %45 : vector<16x128xf32> to vector<1x16x128xf32>
    %47 = vector.broadcast %43 : vector<8x16x1xf32> to vector<8x16x128xf32>
    %48 = vector.broadcast %46 : vector<1x16x128xf32> to vector<8x16x128xf32>
    %49 = arith.mulf %47, %48 : vector<8x16x128xf32>
    %cst_23 = arith.constant dense<0.000000e+00> : vector<8x128xf32>
    %50 = vector.multi_reduction <add>, %49, %cst_23 [1] : vector<8x16x128xf32> to vector<8x128xf32>
    %51 = vector.extract_strided_slice %21 {offsets = [1, 0, 0], sizes = [1, 8, 1], strides = [1, 1, 1]} : vector<2x8x1xf32> to vector<1x8x1xf32>
    %52 = vector.shape_cast %51 : vector<1x8x1xf32> to vector<8x1xf32>
    %cst_24 = arith.constant 5.000000e-01 : f32
    %53 = vector.broadcast %cst_24 : f32 to vector<8x1xf32>
    %54 = arith.mulf %53, %52 : vector<8x1xf32>
    %55 = vector.broadcast %54 : vector<8x1xf32> to vector<8x128xf32>
    %56 = arith.addf %50, %55 : vector<8x128xf32>
    %c1 = arith.constant 1 : index
    %c0_25 = arith.constant 0 : index
    %c0_26 = arith.constant 0 : index
    %57 = vector.load %arg7[%c1, %c0_25, %c0_26] : memref<2x8x128xf32, #tpu.memory_space<vmem>>, vector<1x8x128xf32>
    %58 = vector.shape_cast %57 : vector<1x8x128xf32> to vector<8x128xf32>
    %59 = vector.shape_cast %56 : vector<8x128xf32> to vector<1x8x128xf32>
    tpu.vector_store %arg7[%c1, %c0_25, %c0_26], %59 {strides = array<i32>} : memref<2x8x128xf32, #tpu.memory_space<vmem>>, vector<1x8x128xf32>,
    return
  }
  func.func @transform_0(%arg0: i32) -> (i32, i32, i32) {
    %c0_i32 = arith.constant 0 : i32
    %c0_i32_0 = arith.constant 0 : i32
    %c0_i32_1 = arith.constant 0 : i32
    return %arg0, %c0_i32, %c0_i32_0 : i32, i32, i32
  }
  func.func @transform_1(%arg0: i32) -> (i32, i32, i32) {
    %c0_i32 = arith.constant 0 : i32
    %c0_i32_0 = arith.constant 0 : i32
    %c0_i32_1 = arith.constant 0 : i32
    return %arg0, %c0_i32, %c0_i32_0 : i32, i32, i32
  }
  func.func @transform_2(%arg0: i32) -> (i32, i32, i32) {
    %c0_i32 = arith.constant 0 : i32
    %c0_i32_0 = arith.constant 0 : i32
    %c0_i32_1 = arith.constant 0 : i32
    return %arg0, %c0_i32, %c0_i32_0 : i32, i32, i32
  }
  func.func @transform_3(%arg0: i32) -> (i32, i32) {
    %c0_i32 = arith.constant 0 : i32
    %c0_i32_0 = arith.constant 0 : i32
    %c0_i32_1 = arith.constant 0 : i32
    return %c0_i32, %c0_i32_0 : i32, i32
  }
  func.func @transform_4(%arg0: i32) -> (i32, i32) {
    %c0_i32 = arith.constant 0 : i32
    %c0_i32_0 = arith.constant 0 : i32
    %c0_i32_1 = arith.constant 0 : i32
    return %c0_i32, %c0_i32_0 : i32, i32
  }
  func.func @transform_5(%arg0: i32) -> (i32, i32) {
    %c0_i32 = arith.constant 0 : i32
    %c0_i32_0 = arith.constant 0 : i32
    %c0_i32_1 = arith.constant 0 : i32
    return %c0_i32, %c0_i32_0 : i32, i32
  }
  func.func @transform_6(%arg0: i32) -> (i32, i32, i32) {
    %c0_i32 = arith.constant 0 : i32
    %c0_i32_0 = arith.constant 0 : i32
    %c0_i32_1 = arith.constant 0 : i32
    return %arg0, %c0_i32, %c0_i32_0 : i32, i32, i32
  }
}

</mosaic_0001>

<llo_original>
// kernel: tpu_custom_call.1
$region0: #{tpu_custom_call.1}
  #allocation0 [shape = 'u32[]', space=smem, size = 0x4, offset = 0x4, fixed_abs, tag = 'smem constant byte address 0x4 - core index']
  #allocation1 [shape = 'u32[144,128]{1,0:T(1,128)}', space=vmem, size = 0x12000, scoped, tag = 'internal scratch']
  %s0 = inlined_call_operand.hbm [shape: bf16[4,16,32], index: 0, kind: input, shape index: {}]
  %s1 = inlined_call_operand.hbm [shape: bf16[4,16,32], index: 1, kind: input, shape index: {}]
  %s2 = inlined_call_operand.hbm [shape: f32[4,8,16], index: 2, kind: input, shape index: {}]
  %s3 = inlined_call_operand.vmem [shape: bf16[32,16], index: 3, kind: input, shape index: {}]
  %s4 = inlined_call_operand.vmem [shape: bf16[32,128], index: 4, kind: input, shape index: {}]
  %s5 = inlined_call_operand.vmem [shape: bf16[16,128], index: 5, kind: input, shape index: {}]
  %s6 = inlined_call_operand.hbm [shape: f32[4,8,128], index: 6, kind: output, shape index: {}]
  %s7 = sld [smem:[#allocation0]]
  $region69: #{tpu_custom_call.1} parent=0
    _
  %s9 = ssub.s32 1, %s7
  %s10 = scalar_select 0, %s9, %s7
  $region1: #{tpu_custom_call.1} parent=0
    #allocation2 [shape = 'u8[16384]{0}', space=vmem, size = 0x4000, scoped, tag = 'input window, operand 0']
    #allocation3 [shape = 's32[2]{0}', space=sflag, size = 0x8, scoped, tag = 'scoped memory for tpu_custom_call.1']
    #allocation4 [shape = 's32[2]{0}', space=sflag, size = 0x8, scoped, tag = 'scoped memory for tpu_custom_call.1']
    #allocation5 [shape = 'u8[16384]{0}', space=vmem, size = 0x4000, scoped, tag = 'input window, operand 1']
    #allocation6 [shape = 's32[2]{0}', space=sflag, size = 0x8, scoped, tag = 'scoped memory for tpu_custom_call.1']
    #allocation7 [shape = 'u8[16384]{0}', space=vmem, size = 0x4000, scoped, tag = 'input window, operand 2']
    #allocation8 [shape = 'u8[16384]{0}', space=vmem, size = 0x4000, scoped, tag = 'output window, operand 0']
    %11 = vsyncpa [#allocation3], 0
    %s12 = scalar_lea.sflag [#allocation3], 1
    %13 = vsyncpa %s12, 0
    %14 = vsyncpa [#allocation6], 0
    %s15 = scalar_lea.sflag [#allocation6], 1
    %16 = vsyncpa %s15, 0
    %17 = vsyncpa [#allocation4], 0
    %s18 = scalar_lea.sflag [#allocation4], 1
    %19 = vsyncpa %s18, 0
    loop: start=0, step=1, limit=4
    $region2: #{tpu_custom_call.1} parent=1 // loop_pre_header
      _
    $region3: #{tpu_custom_call.1} parent=1 // loop_header
      %s21 = sphi 0, %s25
      %p22 = scmp.ge.s32.totalorder %s21, 4
      %s31 = sphi 0, %s33
      %s34 = sphi 0, %s31
      %s35 = sphi 0, %s34
      %s51 = sphi 0, %s35
      %s57 = sphi 0, %s59
      %s60 = sphi 0, %s57
      %s61 = sphi 0, %s60
      %s77 = sphi 0, %s61
      %s83 = sphi 0, %s85
      %s86 = sphi 0, %s83
      %s87 = sphi 0, %s86
      %s103 = sphi 0, %s87
      %s107 = sphi 0, %s107
      %s109 = sphi 0, %s107
      %s110 = sphi 0, %s109
      %s124 = sphi 0, %s110
      %s128 = sphi 0, %s128
      %s130 = sphi 0, %s128
      %s131 = sphi 0, %s130
      %s145 = sphi 0, %s131
      %s149 = sphi 0, %s149
      %s151 = sphi 0, %s149
      %s152 = sphi 0, %s151
      %s166 = sphi 0, %s152
      %s172 = sphi 0, %s174
      %s175 = sphi 0, %s172
      %s176 = sphi 0, %s175
      %s192 = sphi 0, %s176
    $region4: #{tpu_custom_call.1} parent=1 // loop_header_branch
      %24 = sbr.rel (%p22) target = $region8
    $region5: #{tpu_custom_call.1} parent=1 // loop_body
      %s26 = ssub.s32 %s21, 1
      %s27 = ssub.s32 %s21, 2
      %s28 = sadd.s32 %s21, 1
      %s29 = ssub.s32 %s21, %s28
      %p30 = scmp.eq.s32.totalorder %s29, 0
      %s32 = sadd.s32 %s31, 1
      %s33 = scalar_select %p30, %s31, %s32
      %p36 = pneg %p30
      %p37 = scmp.eq.s32.totalorder %s21, 1
      %p38 = por %p36, %p37
      %p39 = scmp.ne.s32.totalorder %s31, %s34
      %p40 = scmp.eq.s32.totalorder %s21, 0
      %p41 = por %p39, %p40
      %p42 = scmp.ne.s32.totalorder %s31, %s34
      %p43 = scmp.eq.s32.totalorder %s26, 1
      %p44 = por %p42, %p43
      %p45 = scmp.ne.s32.totalorder %s34, %s35
      %p46 = scmp.eq.s32.totalorder %s26, 0
      %p47 = por %p45, %p46
      %p48 = scmp.ne.s32.totalorder %s34, %s35
      %p49 = scmp.eq.s32.totalorder %s27, 1
      %p50 = por %p48, %p49
      %p52 = scmp.ne.s32.totalorder %s35, %s51
      %p53 = scmp.eq.s32.totalorder %s27, 0
      %p54 = por %p52, %p53
      %s55 = ssub.s32 %s21, %s28
      %p56 = scmp.eq.s32.totalorder %s55, 0
      %s58 = sadd.s32 %s57, 1
      %s59 = scalar_select %p56, %s57, %s58
      %p62 = pneg %p56
      %p63 = scmp.eq.s32.totalorder %s21, 1
      %p64 = por %p62, %p63
      %p65 = scmp.ne.s32.totalorder %s57, %s60
      %p66 = scmp.eq.s32.totalorder %s21, 0
      %p67 = por %p65, %p66
      %p68 = scmp.ne.s32.totalorder %s57, %s60
      %p69 = scmp.eq.s32.totalorder %s26, 1
      %p70 = por %p68, %p69
      %p71 = scmp.ne.s32.totalorder %s60, %s61
      %p72 = scmp.eq.s32.totalorder %s26, 0
      %p73 = por %p71, %p72
      %p74 = scmp.ne.s32.totalorder %s60, %s61
      %p75 = scmp.eq.s32.totalorder %s27, 1
      %p76 = por %p74, %p75
      %p78 = scmp.ne.s32.totalorder %s61, %s77
      %p79 = scmp.eq.s32.totalorder %s27, 0
      %p80 = por %p78, %p79
      %s81 = ssub.s32 %s21, %s28
      %p82 = scmp.eq.s32.totalorder %s81, 0
      %s84 = sadd.s32 %s83, 1
      %s85 = scalar_select %p82, %s83, %s84
      %p88 = pneg %p82
      %p89 = scmp.eq.s32.totalorder %s21, 1
      %p90 = por %p88, %p89
      %p91 = scmp.ne.s32.totalorder %s83, %s86
      %p92 = scmp.eq.s32.totalorder %s21, 0
      %p93 = por %p91, %p92
      %p94 = scmp.ne.s32.totalorder %s83, %s86
      %p95 = scmp.eq.s32.totalorder %s26, 1
      %p96 = por %p94, %p95
      %p97 = scmp.ne.s32.totalorder %s86, %s87
      %p98 = scmp.eq.s32.totalorder %s26, 0
      %p99 = por %p97, %p98
      %p100 = scmp.ne.s32.totalorder %s86, %s87
      %p101 = scmp.eq.s32.totalorder %s27, 1
      %p102 = por %p100, %p101
      %p104 = scmp.ne.s32.totalorder %s87, %s103
      %p105 = scmp.eq.s32.totalorder %s27, 0
      %p106 = por %p104, %p105
      %s108 = sadd.s32 %s107, 1
      %p111 = scmp.eq.s32.totalorder %s21, 1
      %p112 = scmp.ne.s32.totalorder %s107, %s109
      %p113 = scmp.eq.s32.totalorder %s21, 0
      %p114 = por %p112, %p113
      %p115 = scmp.ne.s32.totalorder %s107, %s109
      %p116 = scmp.eq.s32.totalorder %s26, 1
      %p117 = por %p115, %p116
      %p118 = scmp.ne.s32.totalorder %s109, %s110
      %p119 = scmp.eq.s32.totalorder %s26, 0
      %p120 = por %p118, %p119
      %p121 = scmp.ne.s32.totalorder %s109, %s110
      %p122 = scmp.eq.s32.totalorder %s27, 1
      %p123 = por %p121, %p122
      %p125 = scmp.ne.s32.totalorder %s110, %s124
      %p126 = scmp.eq.s32.totalorder %s27, 0
      %p127 = por %p125, %p126
      %s129 = sadd.s32 %s128, 1
      %p132 = scmp.eq.s32.totalorder %s21, 1
      %p133 = scmp.ne.s32.totalorder %s128, %s130
      %p134 = scmp.eq.s32.totalorder %s21, 0
      %p135 = por %p133, %p134
      %p136 = scmp.ne.s32.totalorder %s128, %s130
      %p137 = scmp.eq.s32.totalorder %s26, 1
      %p138 = por %p136, %p137
      %p139 = scmp.ne.s32.totalorder %s130, %s131
      %p140 = scmp.eq.s32.totalorder %s26, 0
      %p141 = por %p139, %p140
      %p142 = scmp.ne.s32.totalorder %s130, %s131
      %p143 = scmp.eq.s32.totalorder %s27, 1
      %p144 = por %p142, %p143
      %p146 = scmp.ne.s32.totalorder %s131, %s145
      %p147 = scmp.eq.s32.totalorder %s27, 0
      %p148 = por %p146, %p147
      %s150 = sadd.s32 %s149, 1
      %p153 = scmp.eq.s32.totalorder %s21, 1
      %p154 = scmp.ne.s32.totalorder %s149, %s151
      %p155 = scmp.eq.s32.totalorder %s21, 0
      %p156 = por %p154, %p155
      %p157 = scmp.ne.s32.totalorder %s149, %s151
      %p158 = scmp.eq.s32.totalorder %s26, 1
      %p159 = por %p157, %p158
      %p160 = scmp.ne.s32.totalorder %s151, %s152
      %p161 = scmp.eq.s32.totalorder %s26, 0
      %p162 = por %p160, %p161
      %p163 = scmp.ne.s32.totalorder %s151, %s152
      %p164 = scmp.eq.s32.totalorder %s27, 1
      %p165 = por %p163, %p164
      %p167 = scmp.ne.s32.totalorder %s152, %s166
      %p168 = scmp.eq.s32.totalorder %s27, 0
      %p169 = por %p167, %p168
      %s170 = ssub.s32 %s21, %s28
      %p171 = scmp.eq.s32.totalorder %s170, 0
      %s173 = sadd.s32 %s172, 1
      %s174 = scalar_select %p171, %s172, %s173
      %p177 = pneg %p171
      %p178 = scmp.eq.s32.totalorder %s21, 1
      %p179 = por %p177, %p178
      %p180 = scmp.ne.s32.totalorder %s172, %s175
      %p181 = scmp.eq.s32.totalorder %s21, 0
      %p182 = por %p180, %p181
      %p183 = scmp.ne.s32.totalorder %s172, %s175
      %p184 = scmp.eq.s32.totalorder %s26, 1
      %p185 = por %p183, %p184
      %p186 = scmp.ne.s32.totalorder %s175, %s176
      %p187 = scmp.eq.s32.totalorder %s26, 0
      %p188 = por %p186, %p187
      %p189 = scmp.ne.s32.totalorder %s175, %s176
      %p190 = scmp.eq.s32.totalorder %s27, 1
      %p191 = por %p189, %p190
      %p193 = scmp.ne.s32.totalorder %s176, %s192
      %p194 = scmp.eq.s32.totalorder %s27, 0
      %p195 = por %p193, %p194
      %p196 = scmp.le.s32.totalorder 1, %s21
      %p197 = scmp.lt.s32.totalorder %s21, 3
      %p198 = pnand %p196, %p197
      %p199 = pneg %p198
      // Predicated region
      $region9: #{tpu_custom_call.1} parent=5 // pred_check
        _
      $region10: #{tpu_custom_call.1} parent=5 // pred_check_branch
        %201 = sbr.rel (%p198) target = $region12
      $region11: #{tpu_custom_call.1} parent=5 // pred_region
        %s202 = ssub.s32 %s21, 1
        // Predicated region
        $region13: #{tpu_custom_call.1} parent=11 // pred_check
          %p203 = pneg %p120
        $region14: #{tpu_custom_call.1} parent=11 // pred_check_branch
          %205 = sbr.rel (%p203) target = $region16
        $region15: #{tpu_custom_call.1} parent=11 // pred_region
          _
        $region16: #{tpu_custom_call.1} parent=11 // pred_fallthru
          _
        // Predicated region
        $region17: #{tpu_custom_call.1} parent=11 // pred_check
          %p206 = pneg %p141
        $region18: #{tpu_custom_call.1} parent=11 // pred_check_branch
          %208 = sbr.rel (%p206) target = $region20
        $region19: #{tpu_custom_call.1} parent=11 // pred_region
          _
        $region20: #{tpu_custom_call.1} parent=11 // pred_fallthru
          _
        // Predicated region
        $region21: #{tpu_custom_call.1} parent=11 // pred_check
          %p209 = pneg %p162
        $region22: #{tpu_custom_call.1} parent=11 // pred_check_branch
          %211 = sbr.rel (%p209) target = $region24
        $region23: #{tpu_custom_call.1} parent=11 // pred_region
          _
        $region24: #{tpu_custom_call.1} parent=11 // pred_fallthru
          _
      $region12: #{tpu_custom_call.1} parent=5 // pred_fallthru
        _
      %p212 = scmp.lt.s32.totalorder %s21, 2
      // Predicated region
      $region25: #{tpu_custom_call.1} parent=5 // pred_check
        %p213 = pneg %p212
      $region26: #{tpu_custom_call.1} parent=5 // pred_check_branch
        %215 = sbr.rel (%p213) target = $region28
      $region27: #{tpu_custom_call.1} parent=5 // pred_region
        // Predicated region
        $region29: #{tpu_custom_call.1} parent=27 // pred_check
          %p216 = pneg %p41
        $region30: #{tpu_custom_call.1} parent=27 // pred_check_branch
          %218 = sbr.rel (%p216) target = $region32
        $region31: #{tpu_custom_call.1} parent=27 // pred_region
          %s219 = sand.u32 %s31, 1
          %s220 = scalar_lea.sflag [#allocation3], %s219
          %s221 = sand.u32 %s31, 1
          %s222 = smul.addr %s221, 16
          %s223 = scalar_lea.vmem [#allocation2], %s222
          %s224 = smul.u32 2, %s21
          %s226 = ssub.s32 256, 256
          %227 = vsyncadd %s220, %s226
          %s228 = smul.addr %s224, 2
          %s229 = smul.addr %s228, 64
          %s230 = scalar_lea.hbm %s0, %s229
          %s231 = sshll.u32 %s223, 4
          %s232 = int_to_ptr.vmem [resolvable:$true] %s231
          %237 = dma.hbm_to_vmem [thread:$0]  %s230, 256, %s232, %s220, 64, 64, 4
        $region32: #{tpu_custom_call.1} parent=27 // pred_fallthru
          _
        // Predicated region
        $region33: #{tpu_custom_call.1} parent=27 // pred_check
          %p238 = pneg %p67
        $region34: #{tpu_custom_call.1} parent=27 // pred_check_branch
          %240 = sbr.rel (%p238) target = $region36
        $region35: #{tpu_custom_call.1} parent=27 // pred_region
          %s241 = sand.u32 %s21, 1
          %s242 = scalar_lea.sflag [#allocation6], %s241
          %s243 = sand.u32 %s57, 1
          %s244 = smul.addr %s243, 16
          %s245 = scalar_lea.vmem [#allocation5], %s244
          %s246 = smul.u32 2, %s21
          %s248 = ssub.s32 256, 256
          %249 = vsyncadd %s242, %s248
          %s250 = smul.addr %s246, 2
          %s251 = smul.addr %s250, 64
          %s252 = scalar_lea.hbm %s1, %s251
          %s253 = sshll.u32 %s245, 4
          %s254 = int_to_ptr.vmem [resolvable:$true] %s253
          %259 = dma.hbm_to_vmem [thread:$0]  %s252, 256, %s254, %s242, 64, 64, 4
        $region36: #{tpu_custom_call.1} parent=27 // pred_fallthru
          _
        // Predicated region
        $region37: #{tpu_custom_call.1} parent=27 // pred_check
          %p260 = pneg %p93
        $region38: #{tpu_custom_call.1} parent=27 // pred_check_branch
          %262 = sbr.rel (%p260) target = $region40
        $region39: #{tpu_custom_call.1} parent=27 // pred_region
          %s263 = sand.u32 %s21, 1
          %s264 = scalar_lea.sflag [#allocation6], %s263
          %s265 = sand.u32 %s83, 1
          %s266 = smul.addr %s265, 16
          %s267 = scalar_lea.vmem [#allocation7], %s266
          %s268 = smul.u32 2, %s21
          %s270 = ssub.s32 256, 256
          %271 = vsyncadd %s264, %s270
          %s272 = smul.addr %s268, 128
          %s273 = scalar_lea.hbm %s2, %s272
          %s274 = sshll.u32 %s267, 4
          %s275 = int_to_ptr.vmem [resolvable:$true] %s274
          %280 = dma.hbm_to_vmem [thread:$0]  %s273, 256, %s275, %s264, 128, 128, 8
        $region40: #{tpu_custom_call.1} parent=27 // pred_fallthru
          _
      $region28: #{tpu_custom_call.1} parent=5 // pred_fallthru
        _
      %p281 = scmp.le.s32.totalorder 1, %s21
      %p282 = scmp.lt.s32.totalorder %s21, 3
      %p283 = pnand %p281, %p282
      %p284 = pneg %p283
      // Predicated region
      $region41: #{tpu_custom_call.1} parent=5 // pred_check
        _
      $region42: #{tpu_custom_call.1} parent=5 // pred_check_branch
        %286 = sbr.rel (%p283) target = $region44
      $region43: #{tpu_custom_call.1} parent=5 // pred_region
        %s287 = ssub.s32 %s21, 1
        %s288 = sand.u32 %s34, 1
        %s289 = scalar_lea.sflag [#allocation3], %s288
        %s290 = sand.u32 %s34, 1
        %s291 = smul.addr %s290, 16
        %s292 = scalar_lea.vmem [#allocation2], %s291
        // Predicated region
        $region45: #{tpu_custom_call.1} parent=43 // pred_check
          %p293 = pneg %p47
        $region46: #{tpu_custom_call.1} parent=43 // pred_check_branch
          %295 = sbr.rel (%p293) target = $region48
        $region47: #{tpu_custom_call.1} parent=43 // pred_region
          %296 = dma.done %s289, 256
        $region48: #{tpu_custom_call.1} parent=43 // pred_fallthru
          _
        %s297 = sand.u32 %s26, 1
        %s298 = scalar_lea.sflag [#allocation6], %s297
        %s299 = sand.u32 %s60, 1
        %s300 = smul.addr %s299, 16
        %s301 = scalar_lea.vmem [#allocation5], %s300
        // Predicated region
        $region49: #{tpu_custom_call.1} parent=43 // pred_check
          %p302 = pneg %p73
        $region50: #{tpu_custom_call.1} parent=43 // pred_check_branch
          %304 = sbr.rel (%p302) target = $region52
        $region51: #{tpu_custom_call.1} parent=43 // pred_region
          %305 = dma.done %s298, 256
        $region52: #{tpu_custom_call.1} parent=43 // pred_fallthru
          _
        %s306 = sand.u32 %s26, 1
        %s307 = scalar_lea.sflag [#allocation6], %s306
        %s308 = sand.u32 %s86, 1
        %s309 = smul.addr %s308, 16
        %s310 = scalar_lea.vmem [#allocation7], %s309
        // Predicated region
        $region53: #{tpu_custom_call.1} parent=43 // pred_check
          %p311 = pneg %p99
        $region54: #{tpu_custom_call.1} parent=43 // pred_check_branch
          %313 = sbr.rel (%p311) target = $region56
        $region55: #{tpu_custom_call.1} parent=43 // pred_region
          %314 = dma.done %s307, 256
        $region56: #{tpu_custom_call.1} parent=43 // pred_fallthru
          _
        %s315 = sand.u32 %s34, 1
        %s316 = scalar_lea.sflag [#allocation3], %s315
        %s317 = sand.u32 %s34, 1
        %s318 = smul.addr %s317, 16
        %s319 = scalar_lea.vmem [#allocation2], %s318
        %p320 = pneg %p47
        %p321 = pneg %p44
        %s322 = sand.u32 %s26, 1
        %s323 = scalar_lea.sflag [#allocation6], %s322
        %s324 = sand.u32 %s60, 1
        %s325 = smul.addr %s324, 16
        %s326 = scalar_lea.vmem [#allocation5], %s325
        %p327 = pneg %p73
        %p328 = pneg %p70
        %s329 = sand.u32 %s26, 1
        %s330 = scalar_lea.sflag [#allocation6], %s329
        %s331 = sand.u32 %s86, 1
        %s332 = smul.addr %s331, 16
        %s333 = scalar_lea.vmem [#allocation7], %s332
        %p334 = pneg %p99
        %p335 = pneg %p96
        %p336 = pneg %p120
        %p337 = pneg %p117
        %p338 = pneg %p141
        %p339 = pneg %p138
        %p340 = pneg %p162
        %p341 = pneg %p159
        %p342 = pneg %p188
        %p343 = pneg %p185
        %s344 = sand.u32 %s175, 1
        %s345 = scalar_lea.sflag [#allocation4], %s344
        %s346 = sand.u32 %s175, 1
        %s347 = smul.addr %s346, 16
        %s348 = scalar_lea.vmem [#allocation8], %s347
        %s349 = smul.u32 2, %s26
        %s350 = smul.u32 2, %s26
        %s351 = smul.u32 2, %s26
        %s352 = smul.u32 2, %s26
        %v354 = vld [vmem:[%s292] sm:$0xf]
        %v355 = vld [vmem:[%s292 + $0x4] sm:$0xf]
        %v356 = vld [vmem:[%s292 + $0x8] sm:$0xf]
        %v357 = vld [vmem:[%s292 + $0xc] sm:$0xf]
        %v358 = vld [vmem:[%s301] sm:$0xf]
        %v359 = vld [vmem:[%s301 + $0x4] sm:$0xf]
        %v360 = vld [vmem:[%s301 + $0x8] sm:$0xf]
        %v361 = vld [vmem:[%s301 + $0xc] sm:$0xf]
        %v362 = vld [vmem:[%s3] sm:$0xf]
        %v363 = vld [vmem:[%s3 + $0x4] sm:$0xf]
        %v364 = vld [vmem:[%s3 + $0x8] sm:$0xf]
        %v365 = vld [vmem:[%s3 + $0xc] sm:$0xf]
        %v370 = vunpack.c.l.b16 %v358
        %v371 = vunpack.c.l.b16 %v359
        %v372 = vunpack.c.l.b16 %v360
        %v373 = vunpack.c.l.b16 %v361
        %v374 = vpack.c.b16 %v371, %v370
        %v375 = vpack.c.b16 %v373, %v372
        %v380 = vunpack.c.l.b16 %v362
        %v381 = vunpack.c.l.b16 %v363
        %v382 = vunpack.c.l.b16 %v364
        %v383 = vunpack.c.l.b16 %v365
        %v384 = vpack.c.b16 %v381, %v380
        %v385 = vpack.c.b16 %v383, %v382
        %vm388 = vcmask 261120
        %v390 = vsel %vm388, %v374, 0
        %v393 = vsel %vm388, %v375, 0
        %395 = vmatprep.subr.bf16.mxu0 0
        %396 = vmatpush1.bf16.msra.mxu0 %v384
        %397 = vmatprep.subr.bf16.mxu0 0
        %398 = vmatpush1.bf16.msra.mxu0 %v385
        %399 = vmatprep.subr.bf16.mxu0 0
        %400 = vmatpush1.bf16.msra.mxu0 0
        %401 = vmatprep.subr.bf16.mxu0 0
        %402 = vmatpush1.bf16.msra.mxu0 0
        %403 = vmatprep.subr.bf16.mxu0 0
        %404 = vmatpush1.bf16.msra.mxu0 0
        %405 = vmatprep.subr.bf16.mxu0 0
        %406 = vmatpush1.bf16.msra.mxu0 0
        %407 = vmatprep.subr.bf16.mxu0 0
        %408 = vmatpush1.bf16.msra.mxu0 0
        %409 = vmatprep.subr.bf16.mxu0 0
        %410 = vmatpush1.bf16.msra.mxu0 0
        %411 = vmatprep.subr.bf16.mxu0 0
        %412 = vmatpush1.bf16.msra.mxu0 0
        %413 = vmatprep.subr.bf16.mxu0 0
        %414 = vmatpush1.bf16.msra.mxu0 0
        %415 = vmatprep.subr.bf16.mxu0 0
        %416 = vmatpush1.bf16.msra.mxu0 0
        %417 = vmatprep.subr.bf16.mxu0 0
        %418 = vmatpush1.bf16.msra.mxu0 0
        %419 = vmatprep.subr.bf16.mxu0 0
        %420 = vmatpush1.bf16.msra.mxu0 0
        %421 = vmatprep.subr.bf16.mxu0 0
        %422 = vmatpush1.bf16.msra.mxu0 0
        %423 = vmatprep.subr.bf16.mxu0 0
        %424 = vmatpush1.bf16.msra.mxu0 0
        %425 = vmatprep.subr.bf16.mxu0 0
        %426 = vmatpush1.bf16.msra.mxu0 0
        %427 = vmatprep.mubr.bf16.mxu0 0
        %428 = vmatmul.mubr.bf16.gmra.mrb[0].mxu0 %v390
        %v429 = vpop.f32.mrb[0].mxu0
        %v430 = vadd.f32 0.0, %v429
        %v431 = vpop.f32.mrb[0].mxu0
        %v432 = vpop.f32.mrb[0].mxu0
        %v433 = vadd.f32 0.0, %v432
        %v434 = vpop.f32.mrb[0].mxu0
        %435 = vmatprep.mubr.bf16.mxu0 0
        %436 = vmatmul.mubr.bf16.gmra.mrb[0].mxu0 %v393
        %v437 = vpop.f32.mrb[0].mxu0
        %v438 = vadd.f32 0.0, %v437
        %v439 = vpop.f32.mrb[0].mxu0
        %v440 = vpop.f32.mrb[0].mxu0
        %v441 = vadd.f32 0.0, %v440
        %v442 = vpop.f32.mrb[0].mxu0
        %443 = vdwg.mxu0
        %v444 = vxor.u32 %v430, 2147483648
        %v445 = vxor.u32 %v433, 2147483648
        %v446 = vxor.u32 %v438, 2147483648
        %v447 = vxor.u32 %v441, 2147483648
        %v448 = vmul.f32 %v444, 1.442695
        %v449 = vpow.pop %v448
        %v450 = vmul.f32 %v445, 1.442695
        %v451 = vpow.pop %v450
        %v452 = vmul.f32 %v446, 1.442695
        %v453 = vpow.pop %v452
        %v454 = vmul.f32 %v447, 1.442695
        %v455 = vpow.pop %v454
        %v456 = vadd.f32 %v449, 1.0
        %v457 = vadd.f32 %v451, 1.0
        %v458 = vadd.f32 %v453, 1.0
        %v459 = vadd.f32 %v455, 1.0
        %v460 = vrcp.pop %v456
        %v461 = vmul.f32 1.0, %v460
        %v462 = vrcp.pop %v457
        %v463 = vmul.f32 1.0, %v462
        %v464 = vrcp.pop %v458
        %v465 = vmul.f32 1.0, %v464
        %v466 = vrcp.pop %v459
        %v467 = vmul.f32 1.0, %v466
        %v468 = vmul.f32 %v430, %v461
        %v469 = vmul.f32 %v433, %v463
        %v470 = vmul.f32 %v438, %v465
        %v471 = vmul.f32 %v441, %v467
        %v472 = vld [vmem:[%s4] sm:$0xf]
        %v473 = vld [vmem:[%s4 + $0x4] sm:$0xf]
        %v474 = vld [vmem:[%s4 + $0x8] sm:$0xf]
        %v475 = vld [vmem:[%s4 + $0xc] sm:$0xf]
        %v476 = vpack.c.bf16 %v469, %v468
        %v477 = vpack.c.bf16 %v471, %v470
        %v478 = vld [vmem:[%s5] sm:$0xf]
        %v479 = vld [vmem:[%s5 + $0x4] sm:$0xf]
        %v482 = vunpack.c.l.b16 %v478
        %v483 = vunpack.c.l.b16 %v479
        %v484 = vpack.c.b16 %v483, %v482
        %vm486 = vcmask 130048
        %v488 = vsel %vm486, %v476, 0
        %v491 = vsel %vm486, %v477, 0
        %493 = vmatprep.subr.bf16.mxu0 0
        %494 = vmatpush1.bf16.msra.mxu0 %v484
        %495 = vmatprep.subr.bf16.mxu0 0
        %496 = vmatpush1.bf16.msra.mxu0 0
        %497 = vmatprep.subr.bf16.mxu0 0
        %498 = vmatpush1.bf16.msra.mxu0 0
        %499 = vmatprep.subr.bf16.mxu0 0
        %500 = vmatpush1.bf16.msra.mxu0 0
        %501 = vmatprep.subr.bf16.mxu0 0
        %502 = vmatpush1.bf16.msra.mxu0 0
        %503 = vmatprep.subr.bf16.mxu0 0
        %504 = vmatpush1.bf16.msra.mxu0 0
        %505 = vmatprep.subr.bf16.mxu0 0
        %506 = vmatpush1.bf16.msra.mxu0 0
        %507 = vmatprep.subr.bf16.mxu0 0
        %508 = vmatpush1.bf16.msra.mxu0 0
        %509 = vmatprep.subr.bf16.mxu0 0
        %510 = vmatpush1.bf16.msra.mxu0 0
        %511 = vmatprep.subr.bf16.mxu0 0
        %512 = vmatpush1.bf16.msra.mxu0 0
        %513 = vmatprep.subr.bf16.mxu0 0
        %514 = vmatpush1.bf16.msra.mxu0 0
        %515 = vmatprep.subr.bf16.mxu0 0
        %516 = vmatpush1.bf16.msra.mxu0 0
        %517 = vmatprep.subr.bf16.mxu0 0
        %518 = vmatpush1.bf16.msra.mxu0 0
        %519 = vmatprep.subr.bf16.mxu0 0
        %520 = vmatpush1.bf16.msra.mxu0 0
        %521 = vmatprep.subr.bf16.mxu0 0
        %522 = vmatpush1.bf16.msra.mxu0 0
        %523 = vmatprep.subr.bf16.mxu0 0
        %524 = vmatpush1.bf16.msra.mxu0 0
        %525 = vmatprep.mubr.bf16.mxu0 0
        %526 = vmatmul.mubr.bf16.gmra.mrb[0].mxu0 %v488
        %v527 = vpop.f32.mrb[0].mxu0
        %v528 = vadd.f32 0.0, %v527
        %v529 = vpop.f32.mrb[0].mxu0
        %v530 = vpop.f32.mrb[0].mxu0
        %v531 = vadd.f32 0.0, %v530
        %v532 = vpop.f32.mrb[0].mxu0
        %533 = vmatprep.mubr.bf16.mxu0 0
        %534 = vmatmul.mubr.bf16.gmra.mrb[0].mxu0 %v491
        %v535 = vpop.f32.mrb[0].mxu0
        %v536 = vadd.f32 0.0, %v535
        %v537 = vpop.f32.mrb[0].mxu0
        %v538 = vpop.f32.mrb[0].mxu0
        %v539 = vadd.f32 0.0, %v538
        %v540 = vpop.f32.mrb[0].mxu0
        %541 = vdwg.mxu0
        %v546 = vunpack.c.l.b16 %v354
        %v547 = vunpack.c.l.b16 %v355
        %v548 = vunpack.c.l.b16 %v356
        %v549 = vunpack.c.l.b16 %v357
        %v550 = vpack.c.b16 %v547, %v546
        %v551 = vpack.c.b16 %v549, %v548
        %v556 = vunpack.c.l.b16 %v472
        %v557 = vunpack.c.l.b16 %v473
        %v558 = vunpack.c.l.b16 %v474
        %v559 = vunpack.c.l.b16 %v475
        %v560 = vpack.c.b16 %v557, %v556
        %v561 = vpack.c.b16 %v559, %v558
        %v565 = vsel %vm388, %v550, 0
        %v568 = vsel %vm388, %v551, 0
        %570 = vmatprep.subr.bf16.mxu0 0
        %571 = vmatpush1.bf16.msra.mxu0 %v560
        %572 = vmatprep.subr.bf16.mxu0 0
        %573 = vmatpush1.bf16.msra.mxu0 %v561
        %574 = vmatprep.subr.bf16.mxu0 0
        %575 = vmatpush1.bf16.msra.mxu0 0
        %576 = vmatprep.subr.bf16.mxu0 0
        %577 = vmatpush1.bf16.msra.mxu0 0
        %578 = vmatprep.subr.bf16.mxu0 0
        %579 = vmatpush1.bf16.msra.mxu0 0
        %580 = vmatprep.subr.bf16.mxu0 0
        %581 = vmatpush1.bf16.msra.mxu0 0
        %582 = vmatprep.subr.bf16.mxu0 0
        %583 = vmatpush1.bf16.msra.mxu0 0
        %584 = vmatprep.subr.bf16.mxu0 0
        %585 = vmatpush1.bf16.msra.mxu0 0
        %586 = vmatprep.subr.bf16.mxu0 0
        %587 = vmatpush1.bf16.msra.mxu0 0
        %588 = vmatprep.subr.bf16.mxu0 0
        %589 = vmatpush1.bf16.msra.mxu0 0
        %590 = vmatprep.subr.bf16.mxu0 0
        %591 = vmatpush1.bf16.msra.mxu0 0
        %592 = vmatprep.subr.bf16.mxu0 0
        %593 = vmatpush1.bf16.msra.mxu0 0
        %594 = vmatprep.subr.bf16.mxu0 0
        %595 = vmatpush1.bf16.msra.mxu0 0
        %596 = vmatprep.subr.bf16.mxu0 0
        %597 = vmatpush1.bf16.msra.mxu0 0
        %598 = vmatprep.subr.bf16.mxu0 0
        %599 = vmatpush1.bf16.msra.mxu0 0
        %600 = vmatprep.subr.bf16.mxu0 0
        %601 = vmatpush1.bf16.msra.mxu0 0
        %602 = vmatprep.mubr.bf16.mxu0 0
        %603 = vmatmul.mubr.bf16.gmra.mrb[0].mxu0 %v565
        %v604 = vpop.f32.mrb[0].mxu0
        %v605 = vadd.f32 %v528, %v604
        %v606 = vpop.f32.mrb[0].mxu0
        %v607 = vpop.f32.mrb[0].mxu0
        %v608 = vadd.f32 %v531, %v607
        %v609 = vpop.f32.mrb[0].mxu0
        %610 = vmatprep.mubr.bf16.mxu0 0
        %611 = vmatmul.mubr.bf16.gmra.mrb[0].mxu0 %v568
        %v612 = vpop.f32.mrb[0].mxu0
        %v613 = vadd.f32 %v536, %v612
        %v614 = vpop.f32.mrb[0].mxu0
        %v615 = vpop.f32.mrb[0].mxu0
        %v616 = vadd.f32 %v539, %v615
        %v617 = vpop.f32.mrb[0].mxu0
        %618 = vdwg.mxu0
        %v619 = vld [vmem:[%s310] sm:$0xff]
        %v620 = vld [vmem:[%s310 + $0x8] sm:$0xff]
        %v621 = vsel %vm486, %v619, 0.0
        %622 = vadd.xlane.f32.xlu0 %v621
        %v623 = vpop.xlane.xlu0 %622
        %v624 = vsel %vm486, %v620, 0.0
        %625 = vadd.xlane.f32.xlu0 %v624
        %v626 = vpop.xlane.xlu0 %625
        %v627 = vlaneseq
        %v628 = vshrl.u32 %v627, 7
        %v629 = vsub.s32 0, %v628
        %v630 = vrot.slane %v619, %v629
        %632 = vbcast.lane.b32.xlu0 %v630, 256
        %v633 = vpop.permute.xlu0 %632
        %s635 = sor.u32 256, 8
        %636 = vbcast.lane.b32.xlu0 %v630, %s635
        %v637 = vpop.permute.xlu0 %636
        %v638 = vlaneseq
        %v639 = vshrl.u32 %v638, 7
        %v640 = vsub.s32 1, %v639
        %v641 = vrot.slane %v619, %v640
        %643 = vbcast.lane.b32.xlu0 %v641, 256
        %v644 = vpop.permute.xlu0 %643
        %s646 = sor.u32 256, 8
        %647 = vbcast.lane.b32.xlu0 %v641, %s646
        %v648 = vpop.permute.xlu0 %647
        %v649 = vlaneseq
        %v650 = vshrl.u32 %v649, 7
        %v651 = vsub.s32 2, %v650
        %v652 = vrot.slane %v619, %v651
        %654 = vbcast.lane.b32.xlu0 %v652, 256
        %v655 = vpop.permute.xlu0 %654
        %s657 = sor.u32 256, 8
        %658 = vbcast.lane.b32.xlu0 %v652, %s657
        %v659 = vpop.permute.xlu0 %658
        %v660 = vlaneseq
        %v661 = vshrl.u32 %v660, 7
        %v662 = vsub.s32 3, %v661
        %v663 = vrot.slane %v619, %v662
        %665 = vbcast.lane.b32.xlu0 %v663, 256
        %v666 = vpop.permute.xlu0 %665
        %s668 = sor.u32 256, 8
        %669 = vbcast.lane.b32.xlu0 %v663, %s668
        %v670 = vpop.permute.xlu0 %669
        %v671 = vlaneseq
        %v672 = vshrl.u32 %v671, 7
        %v673 = vsub.s32 4, %v672
        %v674 = vrot.slane %v619, %v673
        %676 = vbcast.lane.b32.xlu0 %v674, 256
        %v677 = vpop.permute.xlu0 %676
        %s679 = sor.u32 256, 8
        %680 = vbcast.lane.b32.xlu0 %v674, %s679
        %v681 = vpop.permute.xlu0 %680
        %v682 = vlaneseq
        %v683 = vshrl.u32 %v682, 7
        %v684 = vsub.s32 5, %v683
        %v685 = vrot.slane %v619, %v684
        %687 = vbcast.lane.b32.xlu0 %v685, 256
        %v688 = vpop.permute.xlu0 %687
        %s690 = sor.u32 256, 8
        %691 = vbcast.lane.b32.xlu0 %v685, %s690
        %v692 = vpop.permute.xlu0 %691
        %v693 = vlaneseq
        %v694 = vshrl.u32 %v693, 7
        %v695 = vsub.s32 6, %v694
        %v696 = vrot.slane %v619, %v695
        %698 = vbcast.lane.b32.xlu0 %v696, 256
        %v699 = vpop.permute.xlu0 %698
        %s701 = sor.u32 256, 8
        %702 = vbcast.lane.b32.xlu0 %v696, %s701
        %v703 = vpop.permute.xlu0 %702
        %v704 = vlaneseq
        %v705 = vshrl.u32 %v704, 7
        %v706 = vsub.s32 7, %v705
        %v707 = vrot.slane %v619, %v706
        %709 = vbcast.lane.b32.xlu0 %v707, 256
        %v710 = vpop.permute.xlu0 %709
        %s712 = sor.u32 256, 8
        %713 = vbcast.lane.b32.xlu0 %v707, %s712
        %v714 = vpop.permute.xlu0 %713
        %v715 = vmul.f32 %v633, %v605
        %v716 = vmul.f32 %v637, %v608
        %v717 = vmul.f32 %v644, %v605
        %v718 = vmul.f32 %v648, %v608
        %v719 = vmul.f32 %v655, %v605
        %v720 = vmul.f32 %v659, %v608
        %v721 = vmul.f32 %v666, %v605
        %v722 = vmul.f32 %v670, %v608
        %v723 = vmul.f32 %v677, %v605
        %v724 = vmul.f32 %v681, %v608
        %v725 = vmul.f32 %v688, %v605
        %v726 = vmul.f32 %v692, %v608
        %v727 = vmul.f32 %v699, %v605
        %v728 = vmul.f32 %v703, %v608
        %v729 = vmul.f32 %v710, %v605
        %v730 = vmul.f32 %v714, %v608
        %v731 = vadd.f32 %v715, %v716
        %v732 = vrot.slane %v731, 4
        %v733 = vadd.f32 %v731, %v732
        %v734 = vrot.slane %v733, 2
        %v735 = vadd.f32 %v733, %v734
        %v736 = vrot.slane %v735, 1
        %v737 = vadd.f32 %v735, %v736
        %v738 = vadd.f32 %v717, %v718
        %v739 = vrot.slane %v738, 4
        %v740 = vadd.f32 %v738, %v739
        %v741 = vrot.slane %v740, 2
        %v742 = vadd.f32 %v740, %v741
        %v743 = vrot.slane %v742, 1
        %v744 = vadd.f32 %v742, %v743
        %v745 = vadd.f32 %v719, %v720
        %v746 = vrot.slane %v745, 4
        %v747 = vadd.f32 %v745, %v746
        %v748 = vrot.slane %v747, 2
        %v749 = vadd.f32 %v747, %v748
        %v750 = vrot.slane %v749, 1
        %v751 = vadd.f32 %v749, %v750
        %v752 = vadd.f32 %v721, %v722
        %v753 = vrot.slane %v752, 4
        %v754 = vadd.f32 %v752, %v753
        %v755 = vrot.slane %v754, 2
        %v756 = vadd.f32 %v754, %v755
        %v757 = vrot.slane %v756, 1
        %v758 = vadd.f32 %v756, %v757
        %v759 = vadd.f32 %v723, %v724
        %v760 = vrot.slane %v759, 4
        %v761 = vadd.f32 %v759, %v760
        %v762 = vrot.slane %v761, 2
        %v763 = vadd.f32 %v761, %v762
        %v764 = vrot.slane %v763, 1
        %v765 = vadd.f32 %v763, %v764
        %v766 = vadd.f32 %v725, %v726
        %v767 = vrot.slane %v766, 4
        %v768 = vadd.f32 %v766, %v767
        %v769 = vrot.slane %v768, 2
        %v770 = vadd.f32 %v768, %v769
        %v771 = vrot.slane %v770, 1
        %v772 = vadd.f32 %v770, %v771
        %v773 = vadd.f32 %v727, %v728
        %v774 = vrot.slane %v773, 4
        %v775 = vadd.f32 %v773, %v774
        %v776 = vrot.slane %v775, 2
        %v777 = vadd.f32 %v775, %v776
        %v778 = vrot.slane %v777, 1
        %v779 = vadd.f32 %v777, %v778
        %v780 = vadd.f32 %v729, %v730
        %v781 = vrot.slane %v780, 4
        %v782 = vadd.f32 %v780, %v781
        %v783 = vrot.slane %v782, 2
        %v784 = vadd.f32 %v782, %v783
        %v785 = vrot.slane %v784, 1
        %v786 = vadd.f32 %v784, %v785
        %v787 = vmul.f32 %v623, 0.5
        %v789 = vrot.slane %v787, 1
        %v790 = vrot.slane %v787, 2
        %v791 = vrot.slane %v787, 3
        %v792 = vrot.slane %v787, 4
        %v793 = vrot.slane %v787, 5
        %v794 = vrot.slane %v787, 6
        %v795 = vrot.slane %v787, 7
        %v804 = vadd.f32 %v737, %v787
        %v805 = vadd.f32 %v744, %v789
        %v806 = vadd.f32 %v751, %v790
        %v807 = vadd.f32 %v758, %v791
        %v808 = vadd.f32 %v765, %v792
        %v809 = vadd.f32 %v772, %v793
        %v810 = vadd.f32 %v779, %v794
        %v811 = vadd.f32 %v786, %v795
        %v820 = vrot.slane %v805, 7
        %vm821 = vcmask 1041409
        %v822 = vsel %vm821, %v820, %v804
        %v823 = vrot.slane %v806, 6
        %vm824 = vcmask 1042434
        %v825 = vsel %vm824, %v823, %v822
        %v826 = vrot.slane %v807, 5
        %vm827 = vcmask 1043459
        %v828 = vsel %vm827, %v826, %v825
        %v829 = vrot.slane %v808, 4
        %vm830 = vcmask 1044484
        %v831 = vsel %vm830, %v829, %v828
        %v832 = vrot.slane %v809, 3
        %vm833 = vcmask 1045509
        %v834 = vsel %vm833, %v832, %v831
        %v835 = vrot.slane %v810, 2
        %vm836 = vcmask 1046534
        %v837 = vsel %vm836, %v835, %v834
        %v838 = vrot.slane %v811, 1
        %vm839 = vcmask 1047559
        %v840 = vsel %vm839, %v838, %v837
        %842 = vst [vmem:[%s348] sm:$0xff] %v840
        %v843 = vlaneseq
        %v844 = vshrl.u32 %v843, 7
        %v845 = vsub.s32 0, %v844
        %v846 = vrot.slane %v620, %v845
        %848 = vbcast.lane.b32.xlu0 %v846, 256
        %v849 = vpop.permute.xlu0 %848
        %s851 = sor.u32 256, 8
        %852 = vbcast.lane.b32.xlu0 %v846, %s851
        %v853 = vpop.permute.xlu0 %852
        %v854 = vlaneseq
        %v855 = vshrl.u32 %v854, 7
        %v856 = vsub.s32 1, %v855
        %v857 = vrot.slane %v620, %v856
        %859 = vbcast.lane.b32.xlu0 %v857, 256
        %v860 = vpop.permute.xlu0 %859
        %s862 = sor.u32 256, 8
        %863 = vbcast.lane.b32.xlu0 %v857, %s862
        %v864 = vpop.permute.xlu0 %863
        %v865 = vlaneseq
        %v866 = vshrl.u32 %v865, 7
        %v867 = vsub.s32 2, %v866
        %v868 = vrot.slane %v620, %v867
        %870 = vbcast.lane.b32.xlu0 %v868, 256
        %v871 = vpop.permute.xlu0 %870
        %s873 = sor.u32 256, 8
        %874 = vbcast.lane.b32.xlu0 %v868, %s873
        %v875 = vpop.permute.xlu0 %874
        %v876 = vlaneseq
        %v877 = vshrl.u32 %v876, 7
        %v878 = vsub.s32 3, %v877
        %v879 = vrot.slane %v620, %v878
        %881 = vbcast.lane.b32.xlu0 %v879, 256
        %v882 = vpop.permute.xlu0 %881
        %s884 = sor.u32 256, 8
        %885 = vbcast.lane.b32.xlu0 %v879, %s884
        %v886 = vpop.permute.xlu0 %885
        %v887 = vlaneseq
        %v888 = vshrl.u32 %v887, 7
        %v889 = vsub.s32 4, %v888
        %v890 = vrot.slane %v620, %v889
        %892 = vbcast.lane.b32.xlu0 %v890, 256
        %v893 = vpop.permute.xlu0 %892
        %s895 = sor.u32 256, 8
        %896 = vbcast.lane.b32.xlu0 %v890, %s895
        %v897 = vpop.permute.xlu0 %896
        %v898 = vlaneseq
        %v899 = vshrl.u32 %v898, 7
        %v900 = vsub.s32 5, %v899
        %v901 = vrot.slane %v620, %v900
        %903 = vbcast.lane.b32.xlu0 %v901, 256
        %v904 = vpop.permute.xlu0 %903
        %s906 = sor.u32 256, 8
        %907 = vbcast.lane.b32.xlu0 %v901, %s906
        %v908 = vpop.permute.xlu0 %907
        %v909 = vlaneseq
        %v910 = vshrl.u32 %v909, 7
        %v911 = vsub.s32 6, %v910
        %v912 = vrot.slane %v620, %v911
        %914 = vbcast.lane.b32.xlu0 %v912, 256
        %v915 = vpop.permute.xlu0 %914
        %s917 = sor.u32 256, 8
        %918 = vbcast.lane.b32.xlu0 %v912, %s917
        %v919 = vpop.permute.xlu0 %918
        %v920 = vlaneseq
        %v921 = vshrl.u32 %v920, 7
        %v922 = vsub.s32 7, %v921
        %v923 = vrot.slane %v620, %v922
        %925 = vbcast.lane.b32.xlu0 %v923, 256
        %v926 = vpop.permute.xlu0 %925
        %s928 = sor.u32 256, 8
        %929 = vbcast.lane.b32.xlu0 %v923, %s928
        %v930 = vpop.permute.xlu0 %929
        %v931 = vmul.f32 %v849, %v613
        %v932 = vmul.f32 %v853, %v616
        %v933 = vmul.f32 %v860, %v613
        %v934 = vmul.f32 %v864, %v616
        %v935 = vmul.f32 %v871, %v613
        %v936 = vmul.f32 %v875, %v616
        %v937 = vmul.f32 %v882, %v613
        %v938 = vmul.f32 %v886, %v616
        %v939 = vmul.f32 %v893, %v613
        %v940 = vmul.f32 %v897, %v616
        %v941 = vmul.f32 %v904, %v613
        %v942 = vmul.f32 %v908, %v616
        %v943 = vmul.f32 %v915, %v613
        %v944 = vmul.f32 %v919, %v616
        %v945 = vmul.f32 %v926, %v613
        %v946 = vmul.f32 %v930, %v616
        %v947 = vadd.f32 %v931, %v932
        %v948 = vrot.slane %v947, 4
        %v949 = vadd.f32 %v947, %v948
        %v950 = vrot.slane %v949, 2
        %v951 = vadd.f32 %v949, %v950
        %v952 = vrot.slane %v951, 1
        %v953 = vadd.f32 %v951, %v952
        %v954 = vadd.f32 %v933, %v934
        %v955 = vrot.slane %v954, 4
        %v956 = vadd.f32 %v954, %v955
        %v957 = vrot.slane %v956, 2
        %v958 = vadd.f32 %v956, %v957
        %v959 = vrot.slane %v958, 1
        %v960 = vadd.f32 %v958, %v959
        %v961 = vadd.f32 %v935, %v936
        %v962 = vrot.slane %v961, 4
        %v963 = vadd.f32 %v961, %v962
        %v964 = vrot.slane %v963, 2
        %v965 = vadd.f32 %v963, %v964
        %v966 = vrot.slane %v965, 1
        %v967 = vadd.f32 %v965, %v966
        %v968 = vadd.f32 %v937, %v938
        %v969 = vrot.slane %v968, 4
        %v970 = vadd.f32 %v968, %v969
        %v971 = vrot.slane %v970, 2
        %v972 = vadd.f32 %v970, %v971
        %v973 = vrot.slane %v972, 1
        %v974 = vadd.f32 %v972, %v973
        %v975 = vadd.f32 %v939, %v940
        %v976 = vrot.slane %v975, 4
        %v977 = vadd.f32 %v975, %v976
        %v978 = vrot.slane %v977, 2
        %v979 = vadd.f32 %v977, %v978
        %v980 = vrot.slane %v979, 1
        %v981 = vadd.f32 %v979, %v980
        %v982 = vadd.f32 %v941, %v942
        %v983 = vrot.slane %v982, 4
        %v984 = vadd.f32 %v982, %v983
        %v985 = vrot.slane %v984, 2
        %v986 = vadd.f32 %v984, %v985
        %v987 = vrot.slane %v986, 1
        %v988 = vadd.f32 %v986, %v987
        %v989 = vadd.f32 %v943, %v944
        %v990 = vrot.slane %v989, 4
        %v991 = vadd.f32 %v989, %v990
        %v992 = vrot.slane %v991, 2
        %v993 = vadd.f32 %v991, %v992
        %v994 = vrot.slane %v993, 1
        %v995 = vadd.f32 %v993, %v994
        %v996 = vadd.f32 %v945, %v946
        %v997 = vrot.slane %v996, 4
        %v998 = vadd.f32 %v996, %v997
        %v999 = vrot.slane %v998, 2
        %v1000 = vadd.f32 %v998, %v999
        %v1001 = vrot.slane %v1000, 1
        %v1002 = vadd.f32 %v1000, %v1001
        %v1003 = vmul.f32 %v626, 0.5
        %v1005 = vrot.slane %v1003, 1
        %v1006 = vrot.slane %v1003, 2
        %v1007 = vrot.slane %v1003, 3
        %v1008 = vrot.slane %v1003, 4
        %v1009 = vrot.slane %v1003, 5
        %v1010 = vrot.slane %v1003, 6
        %v1011 = vrot.slane %v1003, 7
        %v1020 = vadd.f32 %v953, %v1003
        %v1021 = vadd.f32 %v960, %v1005
        %v1022 = vadd.f32 %v967, %v1006
        %v1023 = vadd.f32 %v974, %v1007
        %v1024 = vadd.f32 %v981, %v1008
        %v1025 = vadd.f32 %v988, %v1009
        %v1026 = vadd.f32 %v995, %v1010
        %v1027 = vadd.f32 %v1002, %v1011
        %v1036 = vrot.slane %v1021, 7
        %v1037 = vsel %vm821, %v1036, %v1020
        %v1038 = vrot.slane %v1022, 6
        %v1039 = vsel %vm824, %v1038, %v1037
        %v1040 = vrot.slane %v1023, 5
        %v1041 = vsel %vm827, %v1040, %v1039
        %v1042 = vrot.slane %v1024, 4
        %v1043 = vsel %vm830, %v1042, %v1041
        %v1044 = vrot.slane %v1025, 3
        %v1045 = vsel %vm833, %v1044, %v1043
        %v1046 = vrot.slane %v1026, 2
        %v1047 = vsel %vm836, %v1046, %v1045
        %v1048 = vrot.slane %v1027, 1
        %v1049 = vsel %vm839, %v1048, %v1047
        %s1051 = scalar_lea.vmem %s348, 8 [#allocation8]
        %1052 = vst [vmem:[%s1051] sm:$0xff] %v1049
        %s1053 = sand.u32 %s175, 1
        %s1054 = scalar_lea.sflag [#allocation4], %s1053
        %s1055 = sand.u32 %s175, 1
        %s1056 = smul.addr %s1055, 16
        %s1057 = scalar_lea.vmem [#allocation8], %s1056
        // Predicated region
        $region57: #{tpu_custom_call.1} parent=43 // pred_check
          %p1058 = pneg %p185
        $region58: #{tpu_custom_call.1} parent=43 // pred_check_branch
          %1060 = sbr.rel (%p1058) target = $region60
        $region59: #{tpu_custom_call.1} parent=43 // pred_region
          %s1061 = smul.u32 2, %s26
          %s1063 = ssub.s32 256, 256
          %1064 = vsyncadd %s1054, %s1063
          %s1065 = smul.addr %s1061, 128
          %s1066 = scalar_lea.hbm %s6, %s1065
          %s1067 = sshll.u32 %s1057, 4
          %s1068 = int_to_ptr.vmem [resolvable:$true] %s1067
          %1073 = dma.vmem_to_hbm [thread:$0]  %s1068, 256, %s1066, %s1054, 128, 128, 8
        $region60: #{tpu_custom_call.1} parent=43 // pred_fallthru
          _
      $region44: #{tpu_custom_call.1} parent=5 // pred_fallthru
        _
      %p1074 = scmp.le.s32.totalorder 2, %s21
      // Predicated region
      $region61: #{tpu_custom_call.1} parent=5 // pred_check
        %p1075 = pneg %p1074
      $region62: #{tpu_custom_call.1} parent=5 // pred_check_branch
        %1077 = sbr.rel (%p1075) target = $region64
      $region63: #{tpu_custom_call.1} parent=5 // pred_region
        %s1078 = ssub.s32 %s21, 2
        // Predicated region
        $region65: #{tpu_custom_call.1} parent=63 // pred_check
          %p1079 = pneg %p191
        $region66: #{tpu_custom_call.1} parent=63 // pred_check_branch
          %1081 = sbr.rel (%p1079) target = $region68
        $region67: #{tpu_custom_call.1} parent=63 // pred_region
          %s1082 = sand.u32 %s176, 1
          %s1083 = scalar_lea.sflag [#allocation4], %s1082
          %s1084 = sand.u32 %s176, 1
          %s1085 = smul.addr %s1084, 16
          %s1086 = scalar_lea.vmem [#allocation8], %s1085
          %1087 = dma.done %s1083, 256
        $region68: #{tpu_custom_call.1} parent=63 // pred_fallthru
          _
      $region64: #{tpu_custom_call.1} parent=5 // pred_fallthru
        _
    $region6: #{tpu_custom_call.1} parent=1 // loop_footer
      %s25 = sadd.s32 1, %s21
    $region7: #{tpu_custom_call.1} parent=1 // loop_footer_branch
      %20 = sbr.rel target = $region3
    $region8: #{tpu_custom_call.1} parent=1 // loop_exit
      _
    %1088 = vsyncpa [#allocation3], 1
    %s1089 = scalar_lea.sflag [#allocation3], 1
    %1090 = vsyncpa %s1089, 1
    %1091 = vsyncpa [#allocation6], 1
    %s1092 = scalar_lea.sflag [#allocation6], 1
    %1093 = vsyncpa %s1092, 1
    %1094 = vsyncpa [#allocation4], 1
    %s1095 = scalar_lea.sflag [#allocation4], 1
    %1096 = vsyncpa %s1095, 1

</llo_original>
